<compile_context>
chip_gen: v7x
topology: tpu7x:2x2x1
jax: 0.10.0
libtpu: 0.0.40
codegen_flags: <defaults>
</compile_context>

<pallas_src>
import functools

import jax
import jax.numpy as jnp
from jax.experimental import pallas as pl
from jax.experimental.pallas import tpu as pltpu


def _round_up(x, m):
    return (x + m - 1) // m * m


def _largest_divisor(n, limit):
    best = 1
    for d in range(1, n + 1):
        if n % d == 0 and d <= limit:
            best = d
    return best


def _vmem_limit_bytes():
    cap = None
    try:
        info = pltpu.get_tpu_info()
        cap = getattr(info, "vmem_capacity_bytes", None)
    except Exception:
        cap = None
    if not cap:
        cap = 64 * 1024 * 1024          # conservative fallback (v7x physical VMEM)
    return min(int(cap) * 3 // 4, 100 * 1024 * 1024)


# ---------------------------------------------------------------------------
# Kernel 1: direct conv (tap-folded matmuls, SSA accumulation) + BN statistics
# ---------------------------------------------------------------------------
def _conv_stats_kernel(x_ref, w_ref, y_ref, sum_ref, sq_ref, *,
                       kh_taps, oh, ow, stride, bb, tn, jg):
    # grid = (split, group, batch_block, cout_tile); cout_tile innermost so the x block
    # stays resident across it; stats block resident across (batch_block, cout_tile).
    b = pl.program_id(2)
    j = pl.program_id(3)

    @pl.when((b == 0) & (j == 0))
    def _():
        sum_ref[...] = jnp.zeros(sum_ref.shape, sum_ref.dtype)
        sq_ref[...] = jnp.zeros(sq_ref.shape, sq_ref.dtype)

    m_blk = bb * oh * ow

    if kh_taps > 1 and stride != 1:
        xv = x_ref[...]                              # load once, value-slice per tap

    acc = None                                       # SSA accumulator (no ref RMW)
    for kh in range(kh_taps):
        if kh_taps == 1:
            patch = x_ref[...]                       # taps fully folded into K
        elif stride == 1:
            patch = x_ref[:, kh:kh + oh, :, :]       # slice on a major dim: tile-aligned
        else:
            patch = xv[:, kh:kh + (oh - 1) * stride + 1:stride, :, :]
        a = patch.reshape(m_blk, patch.shape[-1])                    # (m_blk, kpad) bf16
        contrib = jnp.dot(a, w_ref[0, kh], preferred_element_type=jnp.float32)
        acc = contrib if acc is None else acc + contrib

    # pre-BN intermediate stored once, bf16 (halves kernel-2 HBM read traffic)
    y_ref[...] = acc.reshape(bb, oh * ow, tn).astype(y_ref.dtype)

    # batch statistics from the un-rounded f32 accumulator
    s = jnp.sum(acc, axis=0)[None, None, :]
    q = jnp.sum(acc * acc, axis=0)[None, None, :]
    if jg == 1:
        sum_ref[...] += s
        sq_ref[...] += q
    else:
        joff = pl.multiple_of(j * tn, 128)
        sum_ref[:, :, pl.ds(joff, tn)] += s
        sq_ref[:, :, pl.ds(joff, tn)] += q


# ---------------------------------------------------------------------------
# Kernel 2: folded BN (scale/shift) + ReLU + in-kernel HWC->CHW permute
# ---------------------------------------------------------------------------
def _bn_relu_kernel(y_ref, scale_ref, shift_ref, o_ref, *, cout_g, has_relu):
    o = y_ref[...].astype(jnp.float32) * scale_ref[...] + shift_ref[...]
    if has_relu:
        o = jnp.maximum(o, 0.0)
    # permute (hw, c) -> (c, hw) on the XLU (spare slot in this HBM-bound pass) and
    # write only the real output channels.
    for i in range(y_ref.shape[0]):
        o_ref[i, 0] = jnp.transpose(o[i], (1, 0))[:cout_g, :]


# ---------------------------------------------------------------------------
# Wrapper: layout plumbing (tap unfold + pad + cast; final NCHW is a free reshape)
# ---------------------------------------------------------------------------
def conv_bn_relu_forward(x_nchw, weight, bias, gamma, beta, *,
                         stride, padding, groups=1,
                         has_bn=True, has_relu=True, eps=1e-5):
    """Matches PyTorch conv_bn_relu.forward in default train() mode
    (BatchNorm normalizes with biased batch statistics)."""
    n, cin, h, w_sp = x_nchw.shape
    cout, cin_g_w, kh_sz, kw_sz = weight.shape
    g = groups
    assert cin % g == 0 and cout % g == 0 and cin_g_w == cin // g
    cin_g = cin // g
    cout_g = cout // g

    oh = (h + 2 * padding - kh_sz) // stride + 1
    ow = (w_sp + 2 * padding - kw_sz) // stride + 1
    ohw = oh * ow
    hp = h + 2 * padding

    coutg_p = _round_up(cout_g, 128)                 # lane-dense output channels

    # --- tap folding: fold KW (and KH when Cin/group is small) into matmul K ---
    fold_h = cin_g * kh_sz * kw_sz <= 256
    taps = 1 if fold_h else kh_sz
    k_fold = (kh_sz if fold_h else 1) * kw_sz * cin_g
    kpad = _round_up(k_fold, 8)
    hdim = oh if fold_h else hp

    vmem_limit = _vmem_limit_bytes()                 # generation-aware scoped VMEM
    budget = int(vmem_limit * 0.6)                   # headroom for compiler scratch

    # --- choose Cout tile (tn) and batch block (bb); prefer bb over tn ---
    target_imgs = max(1, 1024 // ohw)                # ~1024 MXU rows per step

    def step_bytes(bb_, tn_):
        xb = bb_ * hdim * ow * kpad * 2 * 2          # x block, double buffered, bf16
        wb = taps * kpad * tn_ * 2 * 2               # weight block
        yb = bb_ * ohw * tn_ * 2 * 2                 # y block
        accb = bb_ * ohw * tn_ * 4 * 2               # SSA acc (+ spill headroom)
        return xb + wb + yb + accb + 8 * coutg_p * 4

    tn_cands = [d for d in range(coutg_p, 127, -128) if coutg_p % d == 0]
    tn, bb = 128, 1
    for cand in tn_cands:
        cap = 0
        for bb_try in range(min(target_imgs, n), 0, -1):
            if step_bytes(bb_try, cand) <= budget:
                cap = bb_try
                break
        if cap >= min(target_imgs, n):
            tn, bb = cand, cap
            break
        if cand == tn_cands[-1]:
            tn, bb = cand, max(cap, 1)
    jg = coutg_p // tn

    # --- batch padding (zero images are exact no-ops for conv output & stats) ---
    n_pad = _round_up(n, bb)
    nb = n_pad // bb
    nsplit = 2 if nb % 2 == 0 else 1                 # v7x: 2nd TensorCore via parallel axis
    nb_s = nb // nsplit
    gn = g * n_pad

    # input: NCHW -> (G, N_pad, HP, WP, Cin_g) bf16
    x5 = x_nchw.reshape(n, g, cin_g, h, w_sp).transpose(1, 0, 3, 4, 2)
    x5 = jnp.pad(x5, ((0, 0), (0, n_pad - n), (padding, padding),
                      (padding, padding), (0, 0)))
    x_gn = x5.reshape(gn, hp, w_sp + 2 * padding, cin_g).astype(jnp.bfloat16)

    # W-unfold (and H-unfold when fold_h): last dim becomes (KH*)KW*Cin_g so the taps
    # feed the MXU K dim and all in-kernel slicing stays on major dims (no relayout).
    w_idx = (jnp.arange(ow)[:, None] * stride + jnp.arange(kw_sz)[None, :]).reshape(-1)
    xw = jnp.take(x_gn, w_idx, axis=2).reshape(gn, hp, ow, kw_sz * cin_g)
    if fold_h:
        h_idx = (jnp.arange(oh)[:, None] * stride
                 + jnp.arange(kh_sz)[None, :]).reshape(-1)
        xh = jnp.take(xw, h_idx, axis=1).reshape(gn, oh, kh_sz, ow, kw_sz * cin_g)
        x_unf = xh.transpose(0, 1, 3, 2, 4).reshape(gn, oh, ow, k_fold)
    else:
        x_unf = xw
    if kpad != k_fold:
        x_unf = jnp.pad(x_unf, ((0, 0), (0, 0), (0, 0), (0, kpad - k_fold)))

    # weight: (Cout, Cin_g, KH, KW) -> (G, taps, kpad, Coutg_p) bf16, K ordered (kh,)kw,cin
    w5 = weight.reshape(g, cout_g, cin_g, kh_sz, kw_sz).transpose(0, 3, 4, 2, 1)
    wk = w5.reshape(g, taps, k_fold, cout_g)
    w_p = jnp.pad(wk, ((0, 0), (0, 0), (0, kpad - k_fold),
                       (0, coutg_p - cout_g))).astype(jnp.bfloat16)

    x_spec = pl.BlockSpec((bb, hdim, ow, kpad),
                          lambda p, gi, b, j: (gi * nb + p * nb_s + b, 0, 0, 0))
    w_spec = pl.BlockSpec((1, taps, kpad, tn),
                          lambda p, gi, b, j: (gi, 0, 0, j))
    y_spec = pl.BlockSpec((bb, ohw, tn),
                          lambda p, gi, b, j: (gi * nb + p * nb_s + b, 0, j))
    stat_spec = pl.BlockSpec((1, 1, coutg_p),
                             lambda p, gi, b, j: (p * g + gi, 0, 0))

    y_p, sum_p, sq_p = pl.pallas_call(
        functools.partial(_conv_stats_kernel, kh_taps=taps, oh=oh, ow=ow,
                          stride=stride, bb=bb, tn=tn, jg=jg),
        out_shape=(
            jax.ShapeDtypeStruct((gn, ohw, coutg_p), jnp.bfloat16),
            jax.ShapeDtypeStruct((nsplit * g, 1, coutg_p), jnp.float32),
            jax.ShapeDtypeStruct((nsplit * g, 1, coutg_p), jnp.float32),
        ),
        grid_spec=pltpu.PrefetchScalarGridSpec(
            num_scalar_prefetch=0,
            grid=(nsplit, g, nb_s, jg),
            in_specs=[x_spec, w_spec],
            out_specs=[y_spec, stat_spec, stat_spec],
        ),
        compiler_params=pltpu.CompilerParams(
            dimension_semantics=("parallel", "parallel", "arbitrary", "arbitrary"),
            vmem_limit_bytes=vmem_limit),
    )(x_unf, w_p)

    # ---- fold BN (or bias) into a per-channel scale/shift (host side, tiny) ----
    m_count = n * ohw                                # true count (pad images contribute 0)
    ch_sum = jnp.sum(sum_p.reshape(nsplit, g, coutg_p), axis=0)[:, :cout_g].reshape(cout)
    ch_sq = jnp.sum(sq_p.reshape(nsplit, g, coutg_p), axis=0)[:, :cout_g].reshape(cout)

    if has_bn:
        mean = ch_sum / m_count
        # biased variance, as in nn.BatchNorm2d training-mode normalization.
        # TODO(synk): E[y^2]-E[y]^2 loses precision when |mean| >> std; a centered second
        #             reduction would match PyTorch's batch variance more closely.
        var = jnp.maximum(ch_sq / m_count - mean * mean, 0.0)
        inv = gamma * jax.lax.rsqrt(var + eps)
        scale = inv
        shift = beta - mean * inv                    # conv bias cancels exactly under BN
    else:
        scale = jnp.ones((cout,), jnp.float32)
        shift = (bias.astype(jnp.float32) if bias is not None
                 else jnp.zeros((cout,), jnp.float32))

    scale_p = jnp.pad(scale.reshape(g, 1, cout_g),
                      ((0, 0), (0, 0), (0, coutg_p - cout_g))).astype(jnp.float32)
    shift_p = jnp.pad(shift.reshape(g, 1, cout_g),
                      ((0, 0), (0, 0), (0, coutg_p - cout_g))).astype(jnp.float32)

    # ---- kernel 2: scale/shift + ReLU + permute; output (N_pad, G, Cout_g, OH*OW) ----
    per_img2 = (ohw * coutg_p * 2 * 2 + ohw * coutg_p * 4 * 2 + cout_g * ohw * 4 * 2)
    target2 = max(1, min(16, 4096 // ohw))
    cap2 = max(1, budget // max(per_img2, 1))
    bb2 = _largest_divisor(n_pad, max(1, min(target2, cap2, n_pad)))
    nb2 = n_pad // bb2

    out_p = pl.pallas_call(
        functools.partial(_bn_relu_kernel, cout_g=cout_g, has_relu=has_relu),
        out_shape=jax.ShapeDtypeStruct((n_pad, g, cout_g, ohw), jnp.float32),
        grid_spec=pltpu.PrefetchScalarGridSpec(
            num_scalar_prefetch=0,
            grid=(g, nb2),
            in_specs=[
                pl.BlockSpec((bb2, ohw, coutg_p),
                             lambda gi, b: (gi * nb2 + b, 0, 0)),
                pl.BlockSpec((1, 1, coutg_p), lambda gi, b: (gi, 0, 0)),
                pl.BlockSpec((1, 1, coutg_p), lambda gi, b: (gi, 0, 0)),
            ],
            out_specs=pl.BlockSpec((bb2, 1, cout_g, ohw),
                                   lambda gi, b: (b, gi, 0, 0)),
        ),
        compiler_params=pltpu.CompilerParams(
            dimension_semantics=("parallel", "parallel"),
            vmem_limit_bytes=vmem_limit),
    )(y_p, scale_p, shift_p)

    # free reshape to NCHW (group-major channel order matches PyTorch grouped conv)
    out = out_p.reshape(n_pad, cout, oh, ow)
    if n_pad != n:
        out = out[:n]
    return out


if __name__ == "__main__":
    # conv_bn_relu(in_planes=4, out_planes=8, kernel_size=3, stride=1, padding=1)
    N, Cin, H, W = 2, 4, 16, 16
    Cout, K, S, P = 8, 3, 1, 1

    key = jax.random.PRNGKey(0)
    k1, k2, k3, k4, k5 = jax.random.split(key, 5)
    x = jax.random.normal(k1, (N, Cin, H, W), jnp.float32)
    weight = jax.random.normal(k2, (Cout, Cin, K, K), jnp.float32) * 0.1
    bias = jax.random.normal(k3, (Cout,), jnp.float32) * 0.1
    gamma = 1.0 + 0.1 * jax.random.normal(k4, (Cout,), jnp.float32)
    beta = 0.1 * jax.random.normal(k5, (Cout,), jnp.float32)

    out = conv_bn_relu_forward(x, weight, bias, gamma, beta,
                               stride=S, padding=P, groups=1,
                               has_bn=True, has_relu=True)
    out = jax.block_until_ready(out)

    # plain-JAX f32 reference (training-mode BatchNorm, biased batch variance)
    ref = jax.lax.conv_general_dilated(
        x, weight, window_strides=(S, S), padding=[(P, P), (P, P)],
        dimension_numbers=("NCHW", "OIHW", "NCHW"), feature_group_count=1,
        precision=jax.lax.Precision.HIGHEST) + bias[None, :, None, None]
    mean = ref.mean(axis=(0, 2, 3), keepdims=True)
    var = ref.var(axis=(0, 2, 3), keepdims=True)
    ref = (ref - mean) * jax.lax.rsqrt(var + 1e-5) * gamma[None, :, None, None] \
          + beta[None, :, None, None]
    ref = jnp.maximum(ref, 0.0)

    assert out.shape == (N, Cout, H, W)
    # bf16 MXU operands + bf16 pre-BN intermediate -> compare with a loose tolerance
    assert jnp.allclose(out, ref, atol=5e-2, rtol=5e-2), \
        float(jnp.max(jnp.abs(out - ref)))
    print("KERNEL_OK")
</pallas_src>

<mosaic_0001>
module attributes {stable_mosaic.version = 11 : i64} {
  func.func @_conv_stats_kernel(%arg0: i32, %arg1: i32, %arg2: i32, %arg3: i32, %arg4: memref<2x16x16x40xbf16, #tpu.memory_space<vmem>>, %arg5: memref<1x1x40x128xbf16, #tpu.memory_space<vmem>>, %arg6: memref<2x256x128xbf16, #tpu.memory_space<vmem>>, %arg7: memref<1x1x128xf32, #tpu.memory_space<vmem>>, %arg8: memref<1x1x128xf32, #tpu.memory_space<vmem>>) attributes {dimension_semantics = [#tpu.dimension_semantics<parallel>, #tpu.dimension_semantics<parallel>, #tpu.dimension_semantics<arbitrary>, #tpu.dimension_semantics<arbitrary>], iteration_bounds = array<i64: 1, 1, 1, 1>, scalar_prefetch = 0 : i64, scratch_operands = 0 : i64, tpu.core_type = #tpu.core_type<tc>, window_params = [{transform_indices = @transform_0, window_bounds = array<i64: 2, 16, 16, 40>}, {transform_indices = @transform_1, window_bounds = array<i64: 1, 1, 40, 128>}, {transform_indices = @transform_2, window_bounds = array<i64: 2, 256, 128>}, {transform_indices = @transform_3, window_bounds = array<i64: 1, 1, 128>}, {transform_indices = @transform_4, window_bounds = array<i64: 1, 1, 128>}]} {
    %c0_i32 = arith.constant 0 : i32
    %0 = arith.cmpi eq, %arg2, %c0_i32 : i32
    %c0_i32_0 = arith.constant 0 : i32
    %1 = arith.cmpi eq, %arg3, %c0_i32_0 : i32
    %2 = arith.andi %0, %1 : i1
    %3 = arith.extui %2 : i1 to i32
    %c0_i32_1 = arith.constant 0 : i32
    %4 = arith.cmpi ne, %3, %c0_i32_1 : i32
    scf.if %4 {
      %cst_26 = arith.constant 0.000000e+00 : f32
      %24 = vector.broadcast %cst_26 : f32 to vector<1x1x128xf32>
      %c0_27 = arith.constant 0 : index
      %c0_28 = arith.constant 0 : index
      %c0_29 = arith.constant 0 : index
      %25 = vector.load %arg7[%c0_27, %c0_28, %c0_29] : memref<1x1x128xf32, #tpu.memory_space<vmem>>, vector<1x1x128xf32>
      tpu.vector_store %arg7[%c0_27, %c0_28, %c0_29], %24 {strides = array<i32>} : memref<1x1x128xf32, #tpu.memory_space<vmem>>, vector<1x1x128xf32>,
      %cst_30 = arith.constant 0.000000e+00 : f32
      %26 = vector.broadcast %cst_30 : f32 to vector<1x1x128xf32>
      %c0_31 = arith.constant 0 : index
      %c0_32 = arith.constant 0 : index
      %c0_33 = arith.constant 0 : index
      %27 = vector.load %arg8[%c0_31, %c0_32, %c0_33] : memref<1x1x128xf32, #tpu.memory_space<vmem>>, vector<1x1x128xf32>
      tpu.vector_store %arg8[%c0_31, %c0_32, %c0_33], %26 {strides = array<i32>} : memref<1x1x128xf32, #tpu.memory_space<vmem>>, vector<1x1x128xf32>,
    } else {
    }
    %c0 = arith.constant 0 : index
    %c0_2 = arith.constant 0 : index
    %c0_3 = arith.constant 0 : index
    %c0_4 = arith.constant 0 : index
    %5 = vector.load %arg4[%c0, %c0_2, %c0_3, %c0_4] : memref<2x16x16x40xbf16, #tpu.memory_space<vmem>>, vector<2x16x16x40xbf16>
    %6 = vector.shape_cast %5 : vector<2x16x16x40xbf16> to vector<512x40xbf16>
    %c0_5 = arith.constant 0 : index
    %c0_6 = arith.constant 0 : index
    %c0_7 = arith.constant 0 : index
    %c0_8 = arith.constant 0 : index
    %7 = vector.load %arg5[%c0_5, %c0_6, %c0_7, %c0_8] : memref<1x1x40x128xbf16, #tpu.memory_space<vmem>>, vector<1x1x40x128xbf16>
    %8 = vector.shape_cast %7 : vector<1x1x40x128xbf16> to vector<40x128xbf16>
    %cst = arith.constant dense<0.000000e+00> : vector<512x128xf32>
    %9 = tpu.matmul %6, %8, %cst {dimension_numbers = #tpu.dot_dimension_numbers<[1], [0], [0], [1], [0, 0, 1, 1], [], []>} : vector<512x40xbf16>, vector<40x128xbf16>, vector<512x128xf32> -> vector<512x128xf32>
    %10 = vector.shape_cast %9 : vector<512x128xf32> to vector<2x256x128xf32>
    %11 = arith.truncf %10 : vector<2x256x128xf32> to vector<2x256x128xbf16>
    %c0_9 = arith.constant 0 : index
    %c0_10 = arith.constant 0 : index
    %c0_11 = arith.constant 0 : index
    %12 = vector.load %arg6[%c0_9, %c0_10, %c0_11] : memref<2x256x128xbf16, #tpu.memory_space<vmem>>, vector<2x256x128xbf16>
    tpu.vector_store %arg6[%c0_9, %c0_10, %c0_11], %11 {strides = array<i32>} : memref<2x256x128xbf16, #tpu.memory_space<vmem>>, vector<2x256x128xbf16>,
    %cst_12 = arith.constant dense<0.000000e+00> : vector<128xf32>
    %13 = vector.multi_reduction <add>, %9, %cst_12 [0] : vector<512x128xf32> to vector<128xf32>
    %14 = vector.shape_cast %13 : vector<128xf32> to vector<1x1x128xf32>
    %15 = arith.mulf %9, %9 : vector<512x128xf32>
    %cst_13 = arith.constant dense<0.000000e+00> : vector<128xf32>
    %16 = vector.multi_reduction <add>, %15, %cst_13 [0] : vector<512x128xf32> to vector<128xf32>
    %17 = vector.shape_cast %16 : vector<128xf32> to vector<1x1x128xf32>
    %c0_14 = arith.constant 0 : index
    %c0_15 = arith.constant 0 : index
    %c0_16 = arith.constant 0 : index
    %18 = vector.load %arg7[%c0_14, %c0_15, %c0_16] : memref<1x1x128xf32, #tpu.memory_space<vmem>>, vector<1x1x128xf32>
    %19 = arith.addf %18, %14 : vector<1x1x128xf32>
    %c0_17 = arith.constant 0 : index
    %c0_18 = arith.constant 0 : index
    %c0_19 = arith.constant 0 : index
    %20 = vector.load %arg7[%c0_17, %c0_18, %c0_19] : memref<1x1x128xf32, #tpu.memory_space<vmem>>, vector<1x1x128xf32>
    tpu.vector_store %arg7[%c0_17, %c0_18, %c0_19], %19 {strides = array<i32>} : memref<1x1x128xf32, #tpu.memory_space<vmem>>, vector<1x1x128xf32>,
    %c0_20 = arith.constant 0 : index
    %c0_21 = arith.constant 0 : index
    %c0_22 = arith.constant 0 : index
    %21 = vector.load %arg8[%c0_20, %c0_21, %c0_22] : memref<1x1x128xf32, #tpu.memory_space<vmem>>, vector<1x1x128xf32>
    %22 = arith.addf %21, %17 : vector<1x1x128xf32>
    %c0_23 = arith.constant 0 : index
    %c0_24 = arith.constant 0 : index
    %c0_25 = arith.constant 0 : index
    %23 = vector.load %arg8[%c0_23, %c0_24, %c0_25] : memref<1x1x128xf32, #tpu.memory_space<vmem>>, vector<1x1x128xf32>
    tpu.vector_store %arg8[%c0_23, %c0_24, %c0_25], %22 {strides = array<i32>} : memref<1x1x128xf32, #tpu.memory_space<vmem>>, vector<1x1x128xf32>,
    return
  }
  func.func @transform_0(%arg0: i32, %arg1: i32, %arg2: i32, %arg3: i32) -> (i32, i32, i32, i32) {
    %c1_i32 = arith.constant 1 : i32
    %0 = arith.muli %arg1, %c1_i32 : i32
    %c1_i32_0 = arith.constant 1 : i32
    %1 = arith.muli %arg0, %c1_i32_0 : i32
    %2 = arith.addi %0, %1 : i32
    %3 = arith.addi %2, %arg2 : i32
    %c0_i32 = arith.constant 0 : i32
    %c0_i32_1 = arith.constant 0 : i32
    %c0_i32_2 = arith.constant 0 : i32
    %c0_i32_3 = arith.constant 0 : i32
    return %3, %c0_i32, %c0_i32_1, %c0_i32_2 : i32, i32, i32, i32
  }
  func.func @transform_1(%arg0: i32, %arg1: i32, %arg2: i32, %arg3: i32) -> (i32, i32, i32, i32) {
    %c0_i32 = arith.constant 0 : i32
    %c0_i32_0 = arith.constant 0 : i32
    %c0_i32_1 = arith.constant 0 : i32
    return %arg1, %c0_i32, %c0_i32_0, %arg3 : i32, i32, i32, i32
  }
  func.func @transform_2(%arg0: i32, %arg1: i32, %arg2: i32, %arg3: i32) -> (i32, i32, i32) {
    %c1_i32 = arith.constant 1 : i32
    %0 = arith.muli %arg1, %c1_i32 : i32
    %c1_i32_0 = arith.constant 1 : i32
    %1 = arith.muli %arg0, %c1_i32_0 : i32
    %2 = arith.addi %0, %1 : i32
    %3 = arith.addi %2, %arg2 : i32
    %c0_i32 = arith.constant 0 : i32
    %c0_i32_1 = arith.constant 0 : i32
    return %3, %c0_i32, %arg3 : i32, i32, i32
  }
  func.func @transform_3(%arg0: i32, %arg1: i32, %arg2: i32, %arg3: i32) -> (i32, i32, i32) {
    %c1_i32 = arith.constant 1 : i32
    %0 = arith.muli %arg0, %c1_i32 : i32
    %1 = arith.addi %0, %arg1 : i32
    %c0_i32 = arith.constant 0 : i32
    %c0_i32_0 = arith.constant 0 : i32
    %c0_i32_1 = arith.constant 0 : i32
    return %1, %c0_i32, %c0_i32_0 : i32, i32, i32
  }
  func.func @transform_4(%arg0: i32, %arg1: i32, %arg2: i32, %arg3: i32) -> (i32, i32, i32) {
    %c1_i32 = arith.constant 1 : i32
    %0 = arith.muli %arg0, %c1_i32 : i32
    %1 = arith.addi %0, %arg1 : i32
    %c0_i32 = arith.constant 0 : i32
    %c0_i32_0 = arith.constant 0 : i32
    %c0_i32_1 = arith.constant 0 : i32
    return %1, %c0_i32, %c0_i32_0 : i32, i32, i32
  }
}

</mosaic_0001>

<llo_original>
// kernel: tpu_custom_call.1
$region0: #{tpu_custom_call.1}
  #allocation0 [shape = 'u32[]', space=smem, size = 0x4, offset = 0x4, fixed_abs, tag = 'smem constant byte address 0x4 - core index']
  #allocation1 [shape = 'u32[144,128]{1,0:T(1,128)}', space=vmem, size = 0x12000, scoped, tag = 'internal scratch']
  %s0 = inlined_call_operand.hbm [shape: bf16[2,16,16,40], index: 0, kind: input, shape index: {}]
  %s1 = inlined_call_operand.hbm [shape: bf16[1,1,40,128], index: 1, kind: input, shape index: {}]
  %s2 = inlined_call_operand.hbm [shape: bf16[2,256,128], index: 2, kind: output, shape index: {0}]
  %s3 = inlined_call_operand.hbm [shape: f32[1,1,128], index: 3, kind: output, shape index: {1}]
  %s4 = inlined_call_operand.hbm [shape: f32[1,1,128], index: 4, kind: output, shape index: {2}]
  %5 = xla_tuple %s2, %s3, %s4
  %s6 = sld [smem:[#allocation0]]
  $region46: #{tpu_custom_call.1} parent=0
    _
  %s8 = ssub.s32 1, %s6
  %s9 = scalar_select 0, %s8, %s6
  $region1: #{tpu_custom_call.1} parent=0
    #allocation2 [shape = 'u8[131072]{0}', space=vmem, size = 0x20000, scoped, tag = 'input window, operand 0, single buffered']
    #allocation3 [shape = 's32[1]{0}', space=sflag, size = 0x4, scoped, tag = 'scoped memory for tpu_custom_call.1']
    #allocation4 [shape = 's32[1]{0}', space=sflag, size = 0x4, scoped, tag = 'scoped memory for tpu_custom_call.1']
    #allocation5 [shape = 'u8[10240]{0}', space=vmem, size = 0x2800, scoped, tag = 'input window, operand 1, single buffered']
    #allocation6 [shape = 's32[1]{0}', space=sflag, size = 0x4, scoped, tag = 'scoped memory for tpu_custom_call.1']
    #allocation7 [shape = 'u8[131072]{0}', space=vmem, size = 0x20000, scoped, tag = 'output window, operand 0, single buffered']
    #allocation8 [shape = 'u8[512]{0}', space=vmem, size = 0x400, scoped, tag = 'output window, operand 1, single buffered']
    #allocation9 [shape = 's32[1]{0}', space=sflag, size = 0x4, scoped, tag = 'scoped memory for tpu_custom_call.1']
    #allocation10 [shape = 'u8[512]{0}', space=vmem, size = 0x400, scoped, tag = 'output window, operand 2, single buffered']
    %10 = vsyncpa [#allocation3], 0
    %11 = vsyncpa [#allocation6], 0
    %12 = vsyncpa [#allocation4], 0
    %13 = vsyncpa [#allocation9], 0
    // Predicated region
    $region2: #{tpu_custom_call.1} parent=1 // pred_check
      _
    $region3: #{tpu_custom_call.1} parent=1 // pred_check_branch
      %15 = sbr.rel (0) target = $region5
    $region4: #{tpu_custom_call.1} parent=1 // pred_region
      %s16 = sadd.s32 0, 0
      %s17 = sadd.s32 %s16, 0
      %s18 = smul.u32 2, %s17
      %s20 = ssub.s32 4096, 4096
      %21 = vsyncadd [#allocation3], %s20
      %s22 = smul.addr %s18, 32
      %s23 = smul.addr %s22, 64
      %s24 = scalar_lea.hbm %s0, %s23
      %s25 = sshll.u32 [#allocation2], 4
      %s26 = int_to_ptr.vmem [resolvable:$true] %s25
      %31 = dma.hbm_to_vmem [thread:$0]  %s24, 4096, %s26, [#allocation3], 64, 64, 4
    $region5: #{tpu_custom_call.1} parent=1 // pred_fallthru
      _
    // Predicated region
    $region6: #{tpu_custom_call.1} parent=1 // pred_check
      _
    $region7: #{tpu_custom_call.1} parent=1 // pred_check_branch
      %33 = sbr.rel (0) target = $region9
    $region8: #{tpu_custom_call.1} parent=1 // pred_region
      %s35 = ssub.s32 320, 320
      %36 = vsyncadd [#allocation6], %s35
      %s37 = sshll.u32 [#allocation5], 4
      %s38 = int_to_ptr.vmem [resolvable:$true] %s37
      %43 = dma.hbm_to_vmem [thread:$0]  %s1, 320, %s38, [#allocation6], 64, 64, 4
    $region9: #{tpu_custom_call.1} parent=1 // pred_fallthru
      _
    // Predicated region
    $region10: #{tpu_custom_call.1} parent=1 // pred_check
      _
    $region11: #{tpu_custom_call.1} parent=1 // pred_check_branch
      %45 = sbr.rel (0) target = $region13
    $region12: #{tpu_custom_call.1} parent=1 // pred_region
      %46 = dma.done [#allocation3], 4096
    $region13: #{tpu_custom_call.1} parent=1 // pred_fallthru
      _
    // Predicated region
    $region14: #{tpu_custom_call.1} parent=1 // pred_check
      _
    $region15: #{tpu_custom_call.1} parent=1 // pred_check_branch
      %48 = sbr.rel (0) target = $region17
    $region16: #{tpu_custom_call.1} parent=1 // pred_region
      %49 = dma.done [#allocation6], 320
    $region17: #{tpu_custom_call.1} parent=1 // pred_fallthru
      _
    %s50 = sadd.s32 0, 0
    %s51 = sadd.s32 %s50, 0
    %s52 = smul.u32 2, %s51
    %s53 = sadd.s32 0, 0
    %s54 = sadd.s32 %s53, 0
    %s55 = smul.u32 2, %s54
    %s56 = sadd.s32 0, 0
    %s57 = sadd.s32 0, 0
    %p59 = scmp.eq.s32.totalorder 0, 0
    %p60 = scmp.eq.s32.totalorder 0, 0
    %p61 = pnand %p59, %p60
    %p62 = pneg %p61
    // Predicated region
    $region18: #{tpu_custom_call.1} parent=1 // pred_check
      _
    $region19: #{tpu_custom_call.1} parent=1 // pred_check_branch
      %64 = sbr.rel (%p61) target = $region21
    $region20: #{tpu_custom_call.1} parent=1 // pred_region
      %65 = vst [vmem:[#allocation8] sm:$0x1] 0.0
      %66 = vst [vmem:[#allocation10] sm:$0x1] 0.0
    $region21: #{tpu_custom_call.1} parent=1 // pred_fallthru
      _
    %v67 = vld [vmem:[#allocation2] sm:$0xf]
    %v68 = vld [vmem:[#allocation2 + $0x4] sm:$0xf]
    %v69 = vld [vmem:[#allocation2 + $0x8] sm:$0xf]
    %v70 = vld [vmem:[#allocation2 + $0xc] sm:$0xf]
    %v71 = vld [vmem:[#allocation2 + $0x10] sm:$0xf]
    %v72 = vld [vmem:[#allocation2 + $0x14] sm:$0xf]
    %v73 = vld [vmem:[#allocation2 + $0x18] sm:$0xf]
    %v74 = vld [vmem:[#allocation2 + $0x1c] sm:$0xf]
    %v75 = vld [vmem:[#allocation2 + $0x20] sm:$0xf]
    %v76 = vld [vmem:[#allocation2 + $0x24] sm:$0xf]
    %v77 = vld [vmem:[#allocation2 + $0x28] sm:$0xf]
    %v78 = vld [vmem:[#allocation2 + $0x2c] sm:$0xf]
    %v79 = vld [vmem:[#allocation2 + $0x30] sm:$0xf]
    %v80 = vld [vmem:[#allocation2 + $0x34] sm:$0xf]
    %v81 = vld [vmem:[#allocation2 + $0x38] sm:$0xf]
    %v82 = vld [vmem:[#allocation2 + $0x3c] sm:$0xf]
    %v83 = vld [vmem:[#allocation2 + $0x40] sm:$0xf]
    %v84 = vld [vmem:[#allocation2 + $0x44] sm:$0xf]
    %v85 = vld [vmem:[#allocation2 + $0x48] sm:$0xf]
    %v86 = vld [vmem:[#allocation2 + $0x4c] sm:$0xf]
    %v87 = vld [vmem:[#allocation2 + $0x50] sm:$0xf]
    %v88 = vld [vmem:[#allocation2 + $0x54] sm:$0xf]
    %v89 = vld [vmem:[#allocation2 + $0x58] sm:$0xf]
    %v90 = vld [vmem:[#allocation2 + $0x5c] sm:$0xf]
    %v91 = vld [vmem:[#allocation2 + $0x60] sm:$0xf]
    %v92 = vld [vmem:[#allocation2 + $0x64] sm:$0xf]
    %v93 = vld [vmem:[#allocation2 + $0x68] sm:$0xf]
    %v94 = vld [vmem:[#allocation2 + $0x6c] sm:$0xf]
    %v95 = vld [vmem:[#allocation2 + $0x70] sm:$0xf]
    %v96 = vld [vmem:[#allocation2 + $0x74] sm:$0xf]
    %v97 = vld [vmem:[#allocation2 + $0x78] sm:$0xf]
    %v98 = vld [vmem:[#allocation2 + $0x7c] sm:$0xf]
    %v99 = vld [vmem:[#allocation2 + $0x80] sm:$0xf]
    %v100 = vld [vmem:[#allocation2 + $0x84] sm:$0xf]
    %v101 = vld [vmem:[#allocation2 + $0x88] sm:$0xf]
    %v102 = vld [vmem:[#allocation2 + $0x8c] sm:$0xf]
    %v103 = vld [vmem:[#allocation2 + $0x90] sm:$0xf]
    %v104 = vld [vmem:[#allocation2 + $0x94] sm:$0xf]
    %v105 = vld [vmem:[#allocation2 + $0x98] sm:$0xf]
    %v106 = vld [vmem:[#allocation2 + $0x9c] sm:$0xf]
    %v107 = vld [vmem:[#allocation2 + $0xa0] sm:$0xf]
    %v108 = vld [vmem:[#allocation2 + $0xa4] sm:$0xf]
    %v109 = vld [vmem:[#allocation2 + $0xa8] sm:$0xf]
    %v110 = vld [vmem:[#allocation2 + $0xac] sm:$0xf]
    %v111 = vld [vmem:[#allocation2 + $0xb0] sm:$0xf]
    %v112 = vld [vmem:[#allocation2 + $0xb4] sm:$0xf]
    %v113 = vld [vmem:[#allocation2 + $0xb8] sm:$0xf]
    %v114 = vld [vmem:[#allocation2 + $0xbc] sm:$0xf]
    %v115 = vld [vmem:[#allocation2 + $0xc0] sm:$0xf]
    %v116 = vld [vmem:[#allocation2 + $0xc4] sm:$0xf]
    %v117 = vld [vmem:[#allocation2 + $0xc8] sm:$0xf]
    %v118 = vld [vmem:[#allocation2 + $0xcc] sm:$0xf]
    %v119 = vld [vmem:[#allocation2 + $0xd0] sm:$0xf]
    %v120 = vld [vmem:[#allocation2 + $0xd4] sm:$0xf]
    %v121 = vld [vmem:[#allocation2 + $0xd8] sm:$0xf]
    %v122 = vld [vmem:[#allocation2 + $0xdc] sm:$0xf]
    %v123 = vld [vmem:[#allocation2 + $0xe0] sm:$0xf]
    %v124 = vld [vmem:[#allocation2 + $0xe4] sm:$0xf]
    %v125 = vld [vmem:[#allocation2 + $0xe8] sm:$0xf]
    %v126 = vld [vmem:[#allocation2 + $0xec] sm:$0xf]
    %v127 = vld [vmem:[#allocation2 + $0xf0] sm:$0xf]
    %v128 = vld [vmem:[#allocation2 + $0xf4] sm:$0xf]
    %v129 = vld [vmem:[#allocation2 + $0xf8] sm:$0xf]
    %v130 = vld [vmem:[#allocation2 + $0xfc] sm:$0xf]
    %v131 = vld [vmem:[#allocation5] sm:$0xf]
    %v132 = vld [vmem:[#allocation5 + $0x4] sm:$0xf]
    %v133 = vld [vmem:[#allocation5 + $0x8] sm:$0xf]
    %v134 = vld [vmem:[#allocation5 + $0xc] sm:$0xf]
    %v135 = vld [vmem:[#allocation5 + $0x10] sm:$0xf]
    %v200 = vunpack.c.l.b16 %v67
    %v201 = vunpack.c.l.b16 %v68
    %v202 = vunpack.c.l.b16 %v69
    %v203 = vunpack.c.l.b16 %v70
    %v204 = vunpack.c.l.b16 %v71
    %v205 = vunpack.c.l.b16 %v72
    %v206 = vunpack.c.l.b16 %v73
    %v207 = vunpack.c.l.b16 %v74
    %v208 = vunpack.c.l.b16 %v75
    %v209 = vunpack.c.l.b16 %v76
    %v210 = vunpack.c.l.b16 %v77
    %v211 = vunpack.c.l.b16 %v78
    %v212 = vunpack.c.l.b16 %v79
    %v213 = vunpack.c.l.b16 %v80
    %v214 = vunpack.c.l.b16 %v81
    %v215 = vunpack.c.l.b16 %v82
    %v216 = vunpack.c.l.b16 %v83
    %v217 = vunpack.c.l.b16 %v84
    %v218 = vunpack.c.l.b16 %v85
    %v219 = vunpack.c.l.b16 %v86
    %v220 = vunpack.c.l.b16 %v87
    %v221 = vunpack.c.l.b16 %v88
    %v222 = vunpack.c.l.b16 %v89
    %v223 = vunpack.c.l.b16 %v90
    %v224 = vunpack.c.l.b16 %v91
    %v225 = vunpack.c.l.b16 %v92
    %v226 = vunpack.c.l.b16 %v93
    %v227 = vunpack.c.l.b16 %v94
    %v228 = vunpack.c.l.b16 %v95
    %v229 = vunpack.c.l.b16 %v96
    %v230 = vunpack.c.l.b16 %v97
    %v231 = vunpack.c.l.b16 %v98
    %v232 = vunpack.c.l.b16 %v99
    %v233 = vunpack.c.l.b16 %v100
    %v234 = vunpack.c.l.b16 %v101
    %v235 = vunpack.c.l.b16 %v102
    %v236 = vunpack.c.l.b16 %v103
    %v237 = vunpack.c.l.b16 %v104
    %v238 = vunpack.c.l.b16 %v105
    %v239 = vunpack.c.l.b16 %v106
    %v240 = vunpack.c.l.b16 %v107
    %v241 = vunpack.c.l.b16 %v108
    %v242 = vunpack.c.l.b16 %v109
    %v243 = vunpack.c.l.b16 %v110
    %v244 = vunpack.c.l.b16 %v111
    %v245 = vunpack.c.l.b16 %v112
    %v246 = vunpack.c.l.b16 %v113
    %v247 = vunpack.c.l.b16 %v114
    %v248 = vunpack.c.l.b16 %v115
    %v249 = vunpack.c.l.b16 %v116
    %v250 = vunpack.c.l.b16 %v117
    %v251 = vunpack.c.l.b16 %v118
    %v252 = vunpack.c.l.b16 %v119
    %v253 = vunpack.c.l.b16 %v120
    %v254 = vunpack.c.l.b16 %v121
    %v255 = vunpack.c.l.b16 %v122
    %v256 = vunpack.c.l.b16 %v123
    %v257 = vunpack.c.l.b16 %v124
    %v258 = vunpack.c.l.b16 %v125
    %v259 = vunpack.c.l.b16 %v126
    %v260 = vunpack.c.l.b16 %v127
    %v261 = vunpack.c.l.b16 %v128
    %v262 = vunpack.c.l.b16 %v129
    %v263 = vunpack.c.l.b16 %v130
    %v264 = vpack.c.b16 %v201, %v200
    %v265 = vpack.c.b16 %v203, %v202
    %v266 = vpack.c.b16 %v205, %v204
    %v267 = vpack.c.b16 %v207, %v206
    %v268 = vpack.c.b16 %v209, %v208
    %v269 = vpack.c.b16 %v211, %v210
    %v270 = vpack.c.b16 %v213, %v212
    %v271 = vpack.c.b16 %v215, %v214
    %v272 = vpack.c.b16 %v217, %v216
    %v273 = vpack.c.b16 %v219, %v218
    %v274 = vpack.c.b16 %v221, %v220
    %v275 = vpack.c.b16 %v223, %v222
    %v276 = vpack.c.b16 %v225, %v224
    %v277 = vpack.c.b16 %v227, %v226
    %v278 = vpack.c.b16 %v229, %v228
    %v279 = vpack.c.b16 %v231, %v230
    %v280 = vpack.c.b16 %v233, %v232
    %v281 = vpack.c.b16 %v235, %v234
    %v282 = vpack.c.b16 %v237, %v236
    %v283 = vpack.c.b16 %v239, %v238
    %v284 = vpack.c.b16 %v241, %v240
    %v285 = vpack.c.b16 %v243, %v242
    %v286 = vpack.c.b16 %v245, %v244
    %v287 = vpack.c.b16 %v247, %v246
    %v288 = vpack.c.b16 %v249, %v248
    %v289 = vpack.c.b16 %v251, %v250
    %v290 = vpack.c.b16 %v253, %v252
    %v291 = vpack.c.b16 %v255, %v254
    %v292 = vpack.c.b16 %v257, %v256
    %v293 = vpack.c.b16 %v259, %v258
    %v294 = vpack.c.b16 %v261, %v260
    %v295 = vpack.c.b16 %v263, %v262
    %v301 = vunpack.c.l.b16 %v131
    %v302 = vunpack.c.l.b16 %v132
    %v303 = vunpack.c.l.b16 %v133
    %v304 = vunpack.c.l.b16 %v134
    %v305 = vunpack.c.l.b16 %v135
    %v306 = vpack.c.b16 %v302, %v301
    %v307 = vpack.c.b16 %v304, %v303
    %v308 = vpack.c.b16 %v305, %v305
    %vm311 = vcmask 326656
    %v313 = vsel %vm311, %v264, 0
    %v316 = vsel %vm311, %v265, 0
    %v319 = vsel %vm311, %v266, 0
    %v322 = vsel %vm311, %v267, 0
    %v325 = vsel %vm311, %v268, 0
    %v328 = vsel %vm311, %v269, 0
    %v331 = vsel %vm311, %v270, 0
    %v334 = vsel %vm311, %v271, 0
    %v337 = vsel %vm311, %v272, 0
    %v340 = vsel %vm311, %v273, 0
    %v343 = vsel %vm311, %v274, 0
    %v346 = vsel %vm311, %v275, 0
    %v349 = vsel %vm311, %v276, 0
    %v352 = vsel %vm311, %v277, 0
    %v355 = vsel %vm311, %v278, 0
    %v358 = vsel %vm311, %v279, 0
    %v361 = vsel %vm311, %v280, 0
    %v364 = vsel %vm311, %v281, 0
    %v367 = vsel %vm311, %v282, 0
    %v370 = vsel %vm311, %v283, 0
    %v373 = vsel %vm311, %v284, 0
    %v376 = vsel %vm311, %v285, 0
    %v379 = vsel %vm311, %v286, 0
    %v382 = vsel %vm311, %v287, 0
    %v385 = vsel %vm311, %v288, 0
    %v388 = vsel %vm311, %v289, 0
    %v391 = vsel %vm311, %v290, 0
    %v394 = vsel %vm311, %v291, 0
    %v397 = vsel %vm311, %v292, 0
    %v400 = vsel %vm311, %v293, 0
    %v403 = vsel %vm311, %v294, 0
    %v406 = vsel %vm311, %v295, 0
    %vm408 = vcmask 1043456
    %v410 = vsel %vm408, %v308, 0
    %412 = vmatprep.subr.bf16.mxu0 0
    %413 = vmatpush1.bf16.msra.mxu0 %v306
    %414 = vmatprep.subr.bf16.mxu0 0
    %415 = vmatpush1.bf16.msra.mxu0 %v307
    %416 = vmatprep.subr.bf16.mxu0 0
    %417 = vmatpush1.bf16.msra.mxu0 %v410
    %418 = vmatprep.subr.bf16.mxu0 0
    %419 = vmatpush1.bf16.msra.mxu0 0
    %420 = vmatprep.subr.bf16.mxu0 0
    %421 = vmatpush1.bf16.msra.mxu0 0
    %422 = vmatprep.subr.bf16.mxu0 0
    %423 = vmatpush1.bf16.msra.mxu0 0
    %424 = vmatprep.subr.bf16.mxu0 0
    %425 = vmatpush1.bf16.msra.mxu0 0
    %426 = vmatprep.subr.bf16.mxu0 0
    %427 = vmatpush1.bf16.msra.mxu0 0
    %428 = vmatprep.subr.bf16.mxu0 0
    %429 = vmatpush1.bf16.msra.mxu0 0
    %430 = vmatprep.subr.bf16.mxu0 0
    %431 = vmatpush1.bf16.msra.mxu0 0
    %432 = vmatprep.subr.bf16.mxu0 0
    %433 = vmatpush1.bf16.msra.mxu0 0
    %434 = vmatprep.subr.bf16.mxu0 0
    %435 = vmatpush1.bf16.msra.mxu0 0
    %436 = vmatprep.subr.bf16.mxu0 0
    %437 = vmatpush1.bf16.msra.mxu0 0
    %438 = vmatprep.subr.bf16.mxu0 0
    %439 = vmatpush1.bf16.msra.mxu0 0
    %440 = vmatprep.subr.bf16.mxu0 0
    %441 = vmatpush1.bf16.msra.mxu0 0
    %442 = vmatprep.subr.bf16.mxu0 0
    %443 = vmatpush1.bf16.msra.mxu0 0
    %444 = vmatprep.mubr.bf16.mxu0 0
    %445 = vmatmul.mubr.bf16.gmra.mrb[0].mxu0 %v313
    %v446 = vpop.f32.mrb[0].mxu0
    %v447 = vadd.f32 0.0, %v446
    %v448 = vpop.f32.mrb[0].mxu0
    %v449 = vpop.f32.mrb[0].mxu0
    %v450 = vadd.f32 0.0, %v449
    %v451 = vpop.f32.mrb[0].mxu0
    %452 = vmatprep.mubr.bf16.mxu0 0
    %453 = vmatmul.mubr.bf16.gmra.mrb[0].mxu0 %v316
    %v454 = vpop.f32.mrb[0].mxu0
    %v455 = vadd.f32 0.0, %v454
    %v456 = vpop.f32.mrb[0].mxu0
    %v457 = vpop.f32.mrb[0].mxu0
    %v458 = vadd.f32 0.0, %v457
    %v459 = vpop.f32.mrb[0].mxu0
    %460 = vmatprep.mubr.bf16.mxu0 0
    %461 = vmatmul.mubr.bf16.gmra.mrb[0].mxu0 %v319
    %v462 = vpop.f32.mrb[0].mxu0
    %v463 = vadd.f32 0.0, %v462
    %v464 = vpop.f32.mrb[0].mxu0
    %v465 = vpop.f32.mrb[0].mxu0
    %v466 = vadd.f32 0.0, %v465
    %v467 = vpop.f32.mrb[0].mxu0
    %468 = vmatprep.mubr.bf16.mxu0 0
    %469 = vmatmul.mubr.bf16.gmra.mrb[0].mxu0 %v322
    %v470 = vpop.f32.mrb[0].mxu0
    %v471 = vadd.f32 0.0, %v470
    %v472 = vpop.f32.mrb[0].mxu0
    %v473 = vpop.f32.mrb[0].mxu0
    %v474 = vadd.f32 0.0, %v473
    %v475 = vpop.f32.mrb[0].mxu0
    %476 = vmatprep.mubr.bf16.mxu0 0
    %477 = vmatmul.mubr.bf16.gmra.mrb[0].mxu0 %v325
    %v478 = vpop.f32.mrb[0].mxu0
    %v479 = vadd.f32 0.0, %v478
    %v480 = vpop.f32.mrb[0].mxu0
    %v481 = vpop.f32.mrb[0].mxu0
    %v482 = vadd.f32 0.0, %v481
    %v483 = vpop.f32.mrb[0].mxu0
    %484 = vmatprep.mubr.bf16.mxu0 0
    %485 = vmatmul.mubr.bf16.gmra.mrb[0].mxu0 %v328
    %v486 = vpop.f32.mrb[0].mxu0
    %v487 = vadd.f32 0.0, %v486
    %v488 = vpop.f32.mrb[0].mxu0
    %v489 = vpop.f32.mrb[0].mxu0
    %v490 = vadd.f32 0.0, %v489
    %v491 = vpop.f32.mrb[0].mxu0
    %492 = vmatprep.mubr.bf16.mxu0 0
    %493 = vmatmul.mubr.bf16.gmra.mrb[0].mxu0 %v331
    %v494 = vpop.f32.mrb[0].mxu0
    %v495 = vadd.f32 0.0, %v494
    %v496 = vpop.f32.mrb[0].mxu0
    %v497 = vpop.f32.mrb[0].mxu0
    %v498 = vadd.f32 0.0, %v497
    %v499 = vpop.f32.mrb[0].mxu0
    %500 = vmatprep.mubr.bf16.mxu0 0
    %501 = vmatmul.mubr.bf16.gmra.mrb[0].mxu0 %v334
    %v502 = vpop.f32.mrb[0].mxu0
    %v503 = vadd.f32 0.0, %v502
    %v504 = vpop.f32.mrb[0].mxu0
    %v505 = vpop.f32.mrb[0].mxu0
    %v506 = vadd.f32 0.0, %v505
    %v507 = vpop.f32.mrb[0].mxu0
    %508 = vmatprep.mubr.bf16.mxu0 0
    %509 = vmatmul.mubr.bf16.gmra.mrb[0].mxu0 %v337
    %v510 = vpop.f32.mrb[0].mxu0
    %v511 = vadd.f32 0.0, %v510
    %v512 = vpop.f32.mrb[0].mxu0
    %v513 = vpop.f32.mrb[0].mxu0
    %v514 = vadd.f32 0.0, %v513
    %v515 = vpop.f32.mrb[0].mxu0
    %516 = vmatprep.mubr.bf16.mxu0 0
    %517 = vmatmul.mubr.bf16.gmra.mrb[0].mxu0 %v340
    %v518 = vpop.f32.mrb[0].mxu0
    %v519 = vadd.f32 0.0, %v518
    %v520 = vpop.f32.mrb[0].mxu0
    %v521 = vpop.f32.mrb[0].mxu0
    %v522 = vadd.f32 0.0, %v521
    %v523 = vpop.f32.mrb[0].mxu0
    %524 = vmatprep.mubr.bf16.mxu0 0
    %525 = vmatmul.mubr.bf16.gmra.mrb[0].mxu0 %v343
    %v526 = vpop.f32.mrb[0].mxu0
    %v527 = vadd.f32 0.0, %v526
    %v528 = vpop.f32.mrb[0].mxu0
    %v529 = vpop.f32.mrb[0].mxu0
    %v530 = vadd.f32 0.0, %v529
    %v531 = vpop.f32.mrb[0].mxu0
    %532 = vmatprep.mubr.bf16.mxu0 0
    %533 = vmatmul.mubr.bf16.gmra.mrb[0].mxu0 %v346
    %v534 = vpop.f32.mrb[0].mxu0
    %v535 = vadd.f32 0.0, %v534
    %v536 = vpop.f32.mrb[0].mxu0
    %v537 = vpop.f32.mrb[0].mxu0
    %v538 = vadd.f32 0.0, %v537
    %v539 = vpop.f32.mrb[0].mxu0
    %540 = vmatprep.mubr.bf16.mxu0 0
    %541 = vmatmul.mubr.bf16.gmra.mrb[0].mxu0 %v349
    %v542 = vpop.f32.mrb[0].mxu0
    %v543 = vadd.f32 0.0, %v542
    %v544 = vpop.f32.mrb[0].mxu0
    %v545 = vpop.f32.mrb[0].mxu0
    %v546 = vadd.f32 0.0, %v545
    %v547 = vpop.f32.mrb[0].mxu0
    %548 = vmatprep.mubr.bf16.mxu0 0
    %549 = vmatmul.mubr.bf16.gmra.mrb[0].mxu0 %v352
    %v550 = vpop.f32.mrb[0].mxu0
    %v551 = vadd.f32 0.0, %v550
    %v552 = vpop.f32.mrb[0].mxu0
    %v553 = vpop.f32.mrb[0].mxu0
    %v554 = vadd.f32 0.0, %v553
    %v555 = vpop.f32.mrb[0].mxu0
    %556 = vmatprep.mubr.bf16.mxu0 0
    %557 = vmatmul.mubr.bf16.gmra.mrb[0].mxu0 %v355
    %v558 = vpop.f32.mrb[0].mxu0
    %v559 = vadd.f32 0.0, %v558
    %v560 = vpop.f32.mrb[0].mxu0
    %v561 = vpop.f32.mrb[0].mxu0
    %v562 = vadd.f32 0.0, %v561
    %v563 = vpop.f32.mrb[0].mxu0
    %564 = vmatprep.mubr.bf16.mxu0 0
    %565 = vmatmul.mubr.bf16.gmra.mrb[0].mxu0 %v358
    %v566 = vpop.f32.mrb[0].mxu0
    %v567 = vadd.f32 0.0, %v566
    %v568 = vpop.f32.mrb[0].mxu0
    %v569 = vpop.f32.mrb[0].mxu0
    %v570 = vadd.f32 0.0, %v569
    %v571 = vpop.f32.mrb[0].mxu0
    %572 = vmatprep.mubr.bf16.mxu0 0
    %573 = vmatmul.mubr.bf16.gmra.mrb[0].mxu0 %v361
    %v574 = vpop.f32.mrb[0].mxu0
    %v575 = vadd.f32 0.0, %v574
    %v576 = vpop.f32.mrb[0].mxu0
    %v577 = vpop.f32.mrb[0].mxu0
    %v578 = vadd.f32 0.0, %v577
    %v579 = vpop.f32.mrb[0].mxu0
    %580 = vmatprep.mubr.bf16.mxu0 0
    %581 = vmatmul.mubr.bf16.gmra.mrb[0].mxu0 %v364
    %v582 = vpop.f32.mrb[0].mxu0
    %v583 = vadd.f32 0.0, %v582
    %v584 = vpop.f32.mrb[0].mxu0
    %v585 = vpop.f32.mrb[0].mxu0
    %v586 = vadd.f32 0.0, %v585
    %v587 = vpop.f32.mrb[0].mxu0
    %588 = vmatprep.mubr.bf16.mxu0 0
    %589 = vmatmul.mubr.bf16.gmra.mrb[0].mxu0 %v367
    %v590 = vpop.f32.mrb[0].mxu0
    %v591 = vadd.f32 0.0, %v590
    %v592 = vpop.f32.mrb[0].mxu0
    %v593 = vpop.f32.mrb[0].mxu0
    %v594 = vadd.f32 0.0, %v593
    %v595 = vpop.f32.mrb[0].mxu0
    %596 = vmatprep.mubr.bf16.mxu0 0
    %597 = vmatmul.mubr.bf16.gmra.mrb[0].mxu0 %v370
    %v598 = vpop.f32.mrb[0].mxu0
    %v599 = vadd.f32 0.0, %v598
    %v600 = vpop.f32.mrb[0].mxu0
    %v601 = vpop.f32.mrb[0].mxu0
    %v602 = vadd.f32 0.0, %v601
    %v603 = vpop.f32.mrb[0].mxu0
    %604 = vmatprep.mubr.bf16.mxu0 0
    %605 = vmatmul.mubr.bf16.gmra.mrb[0].mxu0 %v373
    %v606 = vpop.f32.mrb[0].mxu0
    %v607 = vadd.f32 0.0, %v606
    %v608 = vpop.f32.mrb[0].mxu0
    %v609 = vpop.f32.mrb[0].mxu0
    %v610 = vadd.f32 0.0, %v609
    %v611 = vpop.f32.mrb[0].mxu0
    %612 = vmatprep.mubr.bf16.mxu0 0
    %613 = vmatmul.mubr.bf16.gmra.mrb[0].mxu0 %v376
    %v614 = vpop.f32.mrb[0].mxu0
    %v615 = vadd.f32 0.0, %v614
    %v616 = vpop.f32.mrb[0].mxu0
    %v617 = vpop.f32.mrb[0].mxu0
    %v618 = vadd.f32 0.0, %v617
    %v619 = vpop.f32.mrb[0].mxu0
    %620 = vmatprep.mubr.bf16.mxu0 0
    %621 = vmatmul.mubr.bf16.gmra.mrb[0].mxu0 %v379
    %v622 = vpop.f32.mrb[0].mxu0
    %v623 = vadd.f32 0.0, %v622
    %v624 = vpop.f32.mrb[0].mxu0
    %v625 = vpop.f32.mrb[0].mxu0
    %v626 = vadd.f32 0.0, %v625
    %v627 = vpop.f32.mrb[0].mxu0
    %628 = vmatprep.mubr.bf16.mxu0 0
    %629 = vmatmul.mubr.bf16.gmra.mrb[0].mxu0 %v382
    %v630 = vpop.f32.mrb[0].mxu0
    %v631 = vadd.f32 0.0, %v630
    %v632 = vpop.f32.mrb[0].mxu0
    %v633 = vpop.f32.mrb[0].mxu0
    %v634 = vadd.f32 0.0, %v633
    %v635 = vpop.f32.mrb[0].mxu0
    %636 = vmatprep.mubr.bf16.mxu0 0
    %637 = vmatmul.mubr.bf16.gmra.mrb[0].mxu0 %v385
    %v638 = vpop.f32.mrb[0].mxu0
    %v639 = vadd.f32 0.0, %v638
    %v640 = vpop.f32.mrb[0].mxu0
    %v641 = vpop.f32.mrb[0].mxu0
    %v642 = vadd.f32 0.0, %v641
    %v643 = vpop.f32.mrb[0].mxu0
    %644 = vmatprep.mubr.bf16.mxu0 0
    %645 = vmatmul.mubr.bf16.gmra.mrb[0].mxu0 %v388
    %v646 = vpop.f32.mrb[0].mxu0
    %v647 = vadd.f32 0.0, %v646
    %v648 = vpop.f32.mrb[0].mxu0
    %v649 = vpop.f32.mrb[0].mxu0
    %v650 = vadd.f32 0.0, %v649
    %v651 = vpop.f32.mrb[0].mxu0
    %652 = vmatprep.mubr.bf16.mxu0 0
    %653 = vmatmul.mubr.bf16.gmra.mrb[0].mxu0 %v391
    %v654 = vpop.f32.mrb[0].mxu0
    %v655 = vadd.f32 0.0, %v654
    %v656 = vpop.f32.mrb[0].mxu0
    %v657 = vpop.f32.mrb[0].mxu0
    %v658 = vadd.f32 0.0, %v657
    %v659 = vpop.f32.mrb[0].mxu0
    %660 = vmatprep.mubr.bf16.mxu0 0
    %661 = vmatmul.mubr.bf16.gmra.mrb[0].mxu0 %v394
    %v662 = vpop.f32.mrb[0].mxu0
    %v663 = vadd.f32 0.0, %v662
    %v664 = vpop.f32.mrb[0].mxu0
    %v665 = vpop.f32.mrb[0].mxu0
    %v666 = vadd.f32 0.0, %v665
    %v667 = vpop.f32.mrb[0].mxu0
    %668 = vmatprep.mubr.bf16.mxu0 0
    %669 = vmatmul.mubr.bf16.gmra.mrb[0].mxu0 %v397
    %v670 = vpop.f32.mrb[0].mxu0
    %v671 = vadd.f32 0.0, %v670
    %v672 = vpop.f32.mrb[0].mxu0
    %v673 = vpop.f32.mrb[0].mxu0
    %v674 = vadd.f32 0.0, %v673
    %v675 = vpop.f32.mrb[0].mxu0
    %676 = vmatprep.mubr.bf16.mxu0 0
    %677 = vmatmul.mubr.bf16.gmra.mrb[0].mxu0 %v400
    %v678 = vpop.f32.mrb[0].mxu0
    %v679 = vadd.f32 0.0, %v678
    %v680 = vpop.f32.mrb[0].mxu0
    %v681 = vpop.f32.mrb[0].mxu0
    %v682 = vadd.f32 0.0, %v681
    %v683 = vpop.f32.mrb[0].mxu0
    %684 = vmatprep.mubr.bf16.mxu0 0
    %685 = vmatmul.mubr.bf16.gmra.mrb[0].mxu0 %v403
    %v686 = vpop.f32.mrb[0].mxu0
    %v687 = vadd.f32 0.0, %v686
    %v688 = vpop.f32.mrb[0].mxu0
    %v689 = vpop.f32.mrb[0].mxu0
    %v690 = vadd.f32 0.0, %v689
    %v691 = vpop.f32.mrb[0].mxu0
    %692 = vmatprep.mubr.bf16.mxu0 0
    %693 = vmatmul.mubr.bf16.gmra.mrb[0].mxu0 %v406
    %v694 = vpop.f32.mrb[0].mxu0
    %v695 = vadd.f32 0.0, %v694
    %v696 = vpop.f32.mrb[0].mxu0
    %v697 = vpop.f32.mrb[0].mxu0
    %v698 = vadd.f32 0.0, %v697
    %v699 = vpop.f32.mrb[0].mxu0
    %700 = vdwg.mxu0
    %v701 = vpack.c.bf16 %v450, %v447
    %v702 = vpack.c.bf16 %v458, %v455
    %v703 = vpack.c.bf16 %v466, %v463
    %v704 = vpack.c.bf16 %v474, %v471
    %v705 = vpack.c.bf16 %v482, %v479
    %v706 = vpack.c.bf16 %v490, %v487
    %v707 = vpack.c.bf16 %v498, %v495
    %v708 = vpack.c.bf16 %v506, %v503
    %v709 = vpack.c.bf16 %v514, %v511
    %v710 = vpack.c.bf16 %v522, %v519
    %v711 = vpack.c.bf16 %v530, %v527
    %v712 = vpack.c.bf16 %v538, %v535
    %v713 = vpack.c.bf16 %v546, %v543
    %v714 = vpack.c.bf16 %v554, %v551
    %v715 = vpack.c.bf16 %v562, %v559
    %v716 = vpack.c.bf16 %v570, %v567
    %v717 = vpack.c.bf16 %v578, %v575
    %v718 = vpack.c.bf16 %v586, %v583
    %v719 = vpack.c.bf16 %v594, %v591
    %v720 = vpack.c.bf16 %v602, %v599
    %v721 = vpack.c.bf16 %v610, %v607
    %v722 = vpack.c.bf16 %v618, %v615
    %v723 = vpack.c.bf16 %v626, %v623
    %v724 = vpack.c.bf16 %v634, %v631
    %v725 = vpack.c.bf16 %v642, %v639
    %v726 = vpack.c.bf16 %v650, %v647
    %v727 = vpack.c.bf16 %v658, %v655
    %v728 = vpack.c.bf16 %v666, %v663
    %v729 = vpack.c.bf16 %v674, %v671
    %v730 = vpack.c.bf16 %v682, %v679
    %v731 = vpack.c.bf16 %v690, %v687
    %v732 = vpack.c.bf16 %v698, %v695
    %v765 = vunpack.c.l.b16 %v701
    %v766 = vunpack.c.h.b16 %v701
    %v767 = vunpack.c.l.b16 %v702
    %v768 = vunpack.c.h.b16 %v702
    %v769 = vunpack.c.l.b16 %v703
    %v770 = vunpack.c.h.b16 %v703
    %v771 = vunpack.c.l.b16 %v704
    %v772 = vunpack.c.h.b16 %v704
    %v773 = vunpack.c.l.b16 %v705
    %v774 = vunpack.c.h.b16 %v705
    %v775 = vunpack.c.l.b16 %v706
    %v776 = vunpack.c.h.b16 %v706
    %v777 = vunpack.c.l.b16 %v707
    %v778 = vunpack.c.h.b16 %v707
    %v779 = vunpack.c.l.b16 %v708
    %v780 = vunpack.c.h.b16 %v708
    %v781 = vunpack.c.l.b16 %v709
    %v782 = vunpack.c.h.b16 %v709
    %v783 = vunpack.c.l.b16 %v710
    %v784 = vunpack.c.h.b16 %v710
    %v785 = vunpack.c.l.b16 %v711
    %v786 = vunpack.c.h.b16 %v711
    %v787 = vunpack.c.l.b16 %v712
    %v788 = vunpack.c.h.b16 %v712
    %v789 = vunpack.c.l.b16 %v713
    %v790 = vunpack.c.h.b16 %v713
    %v791 = vunpack.c.l.b16 %v714
    %v792 = vunpack.c.h.b16 %v714
    %v793 = vunpack.c.l.b16 %v715
    %v794 = vunpack.c.h.b16 %v715
    %v795 = vunpack.c.l.b16 %v716
    %v796 = vunpack.c.h.b16 %v716
    %v797 = vunpack.c.l.b16 %v717
    %v798 = vunpack.c.h.b16 %v717
    %v799 = vunpack.c.l.b16 %v718
    %v800 = vunpack.c.h.b16 %v718
    %v801 = vunpack.c.l.b16 %v719
    %v802 = vunpack.c.h.b16 %v719
    %v803 = vunpack.c.l.b16 %v720
    %v804 = vunpack.c.h.b16 %v720
    %v805 = vunpack.c.l.b16 %v721
    %v806 = vunpack.c.h.b16 %v721
    %v807 = vunpack.c.l.b16 %v722
    %v808 = vunpack.c.h.b16 %v722
    %v809 = vunpack.c.l.b16 %v723
    %v810 = vunpack.c.h.b16 %v723
    %v811 = vunpack.c.l.b16 %v724
    %v812 = vunpack.c.h.b16 %v724
    %v813 = vunpack.c.l.b16 %v725
    %v814 = vunpack.c.h.b16 %v725
    %v815 = vunpack.c.l.b16 %v726
    %v816 = vunpack.c.h.b16 %v726
    %v817 = vunpack.c.l.b16 %v727
    %v818 = vunpack.c.h.b16 %v727
    %v819 = vunpack.c.l.b16 %v728
    %v820 = vunpack.c.h.b16 %v728
    %v821 = vunpack.c.l.b16 %v729
    %v822 = vunpack.c.h.b16 %v729
    %v823 = vunpack.c.l.b16 %v730
    %v824 = vunpack.c.h.b16 %v730
    %v825 = vunpack.c.l.b16 %v731
    %v826 = vunpack.c.h.b16 %v731
    %v827 = vunpack.c.l.b16 %v732
    %v828 = vunpack.c.h.b16 %v732
    %v829 = vpack.c.b16 %v765, %v765
    %v830 = vpack.c.b16 %v766, %v766
    %v831 = vpack.c.b16 %v767, %v767
    %v832 = vpack.c.b16 %v768, %v768
    %v833 = vpack.c.b16 %v769, %v769
    %v834 = vpack.c.b16 %v770, %v770
    %v835 = vpack.c.b16 %v771, %v771
    %v836 = vpack.c.b16 %v772, %v772
    %v837 = vpack.c.b16 %v773, %v773
    %v838 = vpack.c.b16 %v774, %v774
    %v839 = vpack.c.b16 %v775, %v775
    %v840 = vpack.c.b16 %v776, %v776
    %v841 = vpack.c.b16 %v777, %v777
    %v842 = vpack.c.b16 %v778, %v778
    %v843 = vpack.c.b16 %v779, %v779
    %v844 = vpack.c.b16 %v780, %v780
    %v845 = vpack.c.b16 %v781, %v781
    %v846 = vpack.c.b16 %v782, %v782
    %v847 = vpack.c.b16 %v783, %v783
    %v848 = vpack.c.b16 %v784, %v784
    %v849 = vpack.c.b16 %v785, %v785
    %v850 = vpack.c.b16 %v786, %v786
    %v851 = vpack.c.b16 %v787, %v787
    %v852 = vpack.c.b16 %v788, %v788
    %v853 = vpack.c.b16 %v789, %v789
    %v854 = vpack.c.b16 %v790, %v790
    %v855 = vpack.c.b16 %v791, %v791
    %v856 = vpack.c.b16 %v792, %v792
    %v857 = vpack.c.b16 %v793, %v793
    %v858 = vpack.c.b16 %v794, %v794
    %v859 = vpack.c.b16 %v795, %v795
    %v860 = vpack.c.b16 %v796, %v796
    %v861 = vpack.c.b16 %v797, %v797
    %v862 = vpack.c.b16 %v798, %v798
    %v863 = vpack.c.b16 %v799, %v799
    %v864 = vpack.c.b16 %v800, %v800
    %v865 = vpack.c.b16 %v801, %v801
    %v866 = vpack.c.b16 %v802, %v802
    %v867 = vpack.c.b16 %v803, %v803
    %v868 = vpack.c.b16 %v804, %v804
    %v869 = vpack.c.b16 %v805, %v805
    %v870 = vpack.c.b16 %v806, %v806
    %v871 = vpack.c.b16 %v807, %v807
    %v872 = vpack.c.b16 %v808, %v808
    %v873 = vpack.c.b16 %v809, %v809
    %v874 = vpack.c.b16 %v810, %v810
    %v875 = vpack.c.b16 %v811, %v811
    %v876 = vpack.c.b16 %v812, %v812
    %v877 = vpack.c.b16 %v813, %v813
    %v878 = vpack.c.b16 %v814, %v814
    %v879 = vpack.c.b16 %v815, %v815
    %v880 = vpack.c.b16 %v816, %v816
    %v881 = vpack.c.b16 %v817, %v817
    %v882 = vpack.c.b16 %v818, %v818
    %v883 = vpack.c.b16 %v819, %v819
    %v884 = vpack.c.b16 %v820, %v820
    %v885 = vpack.c.b16 %v821, %v821
    %v886 = vpack.c.b16 %v822, %v822
    %v887 = vpack.c.b16 %v823, %v823
    %v888 = vpack.c.b16 %v824, %v824
    %v889 = vpack.c.b16 %v825, %v825
    %v890 = vpack.c.b16 %v826, %v826
    %v891 = vpack.c.b16 %v827, %v827
    %v892 = vpack.c.b16 %v828, %v828
    %957 = vst [vmem:[#allocation7] sm:$0xf] %v829
    %958 = vst [vmem:[#allocation7 + $0x4] sm:$0xf] %v830
    %959 = vst [vmem:[#allocation7 + $0x8] sm:$0xf] %v831
    %960 = vst [vmem:[#allocation7 + $0xc] sm:$0xf] %v832
    %961 = vst [vmem:[#allocation7 + $0x10] sm:$0xf] %v833
    %962 = vst [vmem:[#allocation7 + $0x14] sm:$0xf] %v834
    %963 = vst [vmem:[#allocation7 + $0x18] sm:$0xf] %v835
    %964 = vst [vmem:[#allocation7 + $0x1c] sm:$0xf] %v836
    %965 = vst [vmem:[#allocation7 + $0x20] sm:$0xf] %v837
    %966 = vst [vmem:[#allocation7 + $0x24] sm:$0xf] %v838
    %967 = vst [vmem:[#allocation7 + $0x28] sm:$0xf] %v839
    %968 = vst [vmem:[#allocation7 + $0x2c] sm:$0xf] %v840
    %969 = vst [vmem:[#allocation7 + $0x30] sm:$0xf] %v841
    %970 = vst [vmem:[#allocation7 + $0x34] sm:$0xf] %v842
    %971 = vst [vmem:[#allocation7 + $0x38] sm:$0xf] %v843
    %972 = vst [vmem:[#allocation7 + $0x3c] sm:$0xf] %v844
    %973 = vst [vmem:[#allocation7 + $0x40] sm:$0xf] %v845
    %974 = vst [vmem:[#allocation7 + $0x44] sm:$0xf] %v846
    %975 = vst [vmem:[#allocation7 + $0x48] sm:$0xf] %v847
    %976 = vst [vmem:[#allocation7 + $0x4c] sm:$0xf] %v848
    %977 = vst [vmem:[#allocation7 + $0x50] sm:$0xf] %v849
    %978 = vst [vmem:[#allocation7 + $0x54] sm:$0xf] %v850
    %979 = vst [vmem:[#allocation7 + $0x58] sm:$0xf] %v851
    %980 = vst [vmem:[#allocation7 + $0x5c] sm:$0xf] %v852
    %981 = vst [vmem:[#allocation7 + $0x60] sm:$0xf] %v853
    %982 = vst [vmem:[#allocation7 + $0x64] sm:$0xf] %v854
    %983 = vst [vmem:[#allocation7 + $0x68] sm:$0xf] %v855
    %984 = vst [vmem:[#allocation7 + $0x6c] sm:$0xf] %v856
    %985 = vst [vmem:[#allocation7 + $0x70] sm:$0xf] %v857
    %986 = vst [vmem:[#allocation7 + $0x74] sm:$0xf] %v858
    %987 = vst [vmem:[#allocation7 + $0x78] sm:$0xf] %v859
    %988 = vst [vmem:[#allocation7 + $0x7c] sm:$0xf] %v860
    %989 = vst [vmem:[#allocation7 + $0x80] sm:$0xf] %v861
    %990 = vst [vmem:[#allocation7 + $0x84] sm:$0xf] %v862
    %991 = vst [vmem:[#allocation7 + $0x88] sm:$0xf] %v863
    %992 = vst [vmem:[#allocation7 + $0x8c] sm:$0xf] %v864
    %993 = vst [vmem:[#allocation7 + $0x90] sm:$0xf] %v865
    %994 = vst [vmem:[#allocation7 + $0x94] sm:$0xf] %v866
    %995 = vst [vmem:[#allocation7 + $0x98] sm:$0xf] %v867
    %996 = vst [vmem:[#allocation7 + $0x9c] sm:$0xf] %v868
    %997 = vst [vmem:[#allocation7 + $0xa0] sm:$0xf] %v869
    %998 = vst [vmem:[#allocation7 + $0xa4] sm:$0xf] %v870
    %999 = vst [vmem:[#allocation7 + $0xa8] sm:$0xf] %v871
    %1000 = vst [vmem:[#allocation7 + $0xac] sm:$0xf] %v872
    %1001 = vst [vmem:[#allocation7 + $0xb0] sm:$0xf] %v873
    %1002 = vst [vmem:[#allocation7 + $0xb4] sm:$0xf] %v874
    %1003 = vst [vmem:[#allocation7 + $0xb8] sm:$0xf] %v875
    %1004 = vst [vmem:[#allocation7 + $0xbc] sm:$0xf] %v876
    %1005 = vst [vmem:[#allocation7 + $0xc0] sm:$0xf] %v877
    %1006 = vst [vmem:[#allocation7 + $0xc4] sm:$0xf] %v878
    %1007 = vst [vmem:[#allocation7 + $0xc8] sm:$0xf] %v879
    %1008 = vst [vmem:[#allocation7 + $0xcc] sm:$0xf] %v880
    %1009 = vst [vmem:[#allocation7 + $0xd0] sm:$0xf] %v881
    %1010 = vst [vmem:[#allocation7 + $0xd4] sm:$0xf] %v882
    %1011 = vst [vmem:[#allocation7 + $0xd8] sm:$0xf] %v883
    %1012 = vst [vmem:[#allocation7 + $0xdc] sm:$0xf] %v884
    %1013 = vst [vmem:[#allocation7 + $0xe0] sm:$0xf] %v885
    %1014 = vst [vmem:[#allocation7 + $0xe4] sm:$0xf] %v886
    %1015 = vst [vmem:[#allocation7 + $0xe8] sm:$0xf] %v887
    %1016 = vst [vmem:[#allocation7 + $0xec] sm:$0xf] %v888
    %1017 = vst [vmem:[#allocation7 + $0xf0] sm:$0xf] %v889
    %1018 = vst [vmem:[#allocation7 + $0xf4] sm:$0xf] %v890
    %1019 = vst [vmem:[#allocation7 + $0xf8] sm:$0xf] %v891
    %1020 = vst [vmem:[#allocation7 + $0xfc] sm:$0xf] %v892
    %v1021 = vadd.f32 %v447, %v450
    %v1022 = vadd.f32 %v1021, %v455
    %v1023 = vadd.f32 %v1022, %v458
    %v1024 = vadd.f32 %v1023, %v463
    %v1025 = vadd.f32 %v1024, %v466
    %v1026 = vadd.f32 %v1025, %v471
    %v1027 = vadd.f32 %v1026, %v474
    %v1028 = vadd.f32 %v1027, %v479
    %v1029 = vadd.f32 %v1028, %v482
    %v1030 = vadd.f32 %v1029, %v487
    %v1031 = vadd.f32 %v1030, %v490
    %v1032 = vadd.f32 %v1031, %v495
    %v1033 = vadd.f32 %v1032, %v498
    %v1034 = vadd.f32 %v1033, %v503
    %v1035 = vadd.f32 %v1034, %v506
    %v1036 = vadd.f32 %v1035, %v511
    %v1037 = vadd.f32 %v1036, %v514
    %v1038 = vadd.f32 %v1037, %v519
    %v1039 = vadd.f32 %v1038, %v522
    %v1040 = vadd.f32 %v1039, %v527
    %v1041 = vadd.f32 %v1040, %v530
    %v1042 = vadd.f32 %v1041, %v535
    %v1043 = vadd.f32 %v1042, %v538
    %v1044 = vadd.f32 %v1043, %v543
    %v1045 = vadd.f32 %v1044, %v546
    %v1046 = vadd.f32 %v1045, %v551
    %v1047 = vadd.f32 %v1046, %v554
    %v1048 = vadd.f32 %v1047, %v559
    %v1049 = vadd.f32 %v1048, %v562
    %v1050 = vadd.f32 %v1049, %v567
    %v1051 = vadd.f32 %v1050, %v570
    %v1052 = vadd.f32 %v1051, %v575
    %v1053 = vadd.f32 %v1052, %v578
    %v1054 = vadd.f32 %v1053, %v583
    %v1055 = vadd.f32 %v1054, %v586
    %v1056 = vadd.f32 %v1055, %v591
    %v1057 = vadd.f32 %v1056, %v594
    %v1058 = vadd.f32 %v1057, %v599
    %v1059 = vadd.f32 %v1058, %v602
    %v1060 = vadd.f32 %v1059, %v607
    %v1061 = vadd.f32 %v1060, %v610
    %v1062 = vadd.f32 %v1061, %v615
    %v1063 = vadd.f32 %v1062, %v618
    %v1064 = vadd.f32 %v1063, %v623
    %v1065 = vadd.f32 %v1064, %v626
    %v1066 = vadd.f32 %v1065, %v631
    %v1067 = vadd.f32 %v1066, %v634
    %v1068 = vadd.f32 %v1067, %v639
    %v1069 = vadd.f32 %v1068, %v642
    %v1070 = vadd.f32 %v1069, %v647
    %v1071 = vadd.f32 %v1070, %v650
    %v1072 = vadd.f32 %v1071, %v655
    %v1073 = vadd.f32 %v1072, %v658
    %v1074 = vadd.f32 %v1073, %v663
    %v1075 = vadd.f32 %v1074, %v666
    %v1076 = vadd.f32 %v1075, %v671
    %v1077 = vadd.f32 %v1076, %v674
    %v1078 = vadd.f32 %v1077, %v679
    %v1079 = vadd.f32 %v1078, %v682
    %v1080 = vadd.f32 %v1079, %v687
    %v1081 = vadd.f32 %v1080, %v690
    %v1082 = vadd.f32 %v1081, %v695
    %v1083 = vadd.f32 %v1082, %v698
    %v1084 = vrot.slane %v1083, 4
    %v1085 = vadd.f32 %v1083, %v1084
    %v1086 = vrot.slane %v1085, 2
    %v1087 = vadd.f32 %v1085, %v1086
    %v1088 = vrot.slane %v1087, 1
    %v1089 = vadd.f32 %v1087, %v1088
    %v1090 = vmul.f32 %v447, %v447
    %v1091 = vmul.f32 %v450, %v450
    %v1092 = vmul.f32 %v455, %v455
    %v1093 = vmul.f32 %v458, %v458
    %v1094 = vmul.f32 %v463, %v463
    %v1095 = vmul.f32 %v466, %v466
    %v1096 = vmul.f32 %v471, %v471
    %v1097 = vmul.f32 %v474, %v474
    %v1098 = vmul.f32 %v479, %v479
    %v1099 = vmul.f32 %v482, %v482
    %v1100 = vmul.f32 %v487, %v487
    %v1101 = vmul.f32 %v490, %v490
    %v1102 = vmul.f32 %v495, %v495
    %v1103 = vmul.f32 %v498, %v498
    %v1104 = vmul.f32 %v503, %v503
    %v1105 = vmul.f32 %v506, %v506
    %v1106 = vmul.f32 %v511, %v511
    %v1107 = vmul.f32 %v514, %v514
    %v1108 = vmul.f32 %v519, %v519
    %v1109 = vmul.f32 %v522, %v522
    %v1110 = vmul.f32 %v527, %v527
    %v1111 = vmul.f32 %v530, %v530
    %v1112 = vmul.f32 %v535, %v535
    %v1113 = vmul.f32 %v538, %v538
    %v1114 = vmul.f32 %v543, %v543
    %v1115 = vmul.f32 %v546, %v546
    %v1116 = vmul.f32 %v551, %v551
    %v1117 = vmul.f32 %v554, %v554
    %v1118 = vmul.f32 %v559, %v559
    %v1119 = vmul.f32 %v562, %v562
    %v1120 = vmul.f32 %v567, %v567
    %v1121 = vmul.f32 %v570, %v570
    %v1122 = vmul.f32 %v575, %v575
    %v1123 = vmul.f32 %v578, %v578
    %v1124 = vmul.f32 %v583, %v583
    %v1125 = vmul.f32 %v586, %v586
    %v1126 = vmul.f32 %v591, %v591
    %v1127 = vmul.f32 %v594, %v594
    %v1128 = vmul.f32 %v599, %v599
    %v1129 = vmul.f32 %v602, %v602
    %v1130 = vmul.f32 %v607, %v607
    %v1131 = vmul.f32 %v610, %v610
    %v1132 = vmul.f32 %v615, %v615
    %v1133 = vmul.f32 %v618, %v618
    %v1134 = vmul.f32 %v623, %v623
    %v1135 = vmul.f32 %v626, %v626
    %v1136 = vmul.f32 %v631, %v631
    %v1137 = vmul.f32 %v634, %v634
    %v1138 = vmul.f32 %v639, %v639
    %v1139 = vmul.f32 %v642, %v642
    %v1140 = vmul.f32 %v647, %v647
    %v1141 = vmul.f32 %v650, %v650
    %v1142 = vmul.f32 %v655, %v655
    %v1143 = vmul.f32 %v658, %v658
    %v1144 = vmul.f32 %v663, %v663
    %v1145 = vmul.f32 %v666, %v666
    %v1146 = vmul.f32 %v671, %v671
    %v1147 = vmul.f32 %v674, %v674
    %v1148 = vmul.f32 %v679, %v679
    %v1149 = vmul.f32 %v682, %v682
    %v1150 = vmul.f32 %v687, %v687
    %v1151 = vmul.f32 %v690, %v690
    %v1152 = vmul.f32 %v695, %v695
    %v1153 = vmul.f32 %v698, %v698
    %v1154 = vadd.f32 %v1090, %v1091
    %v1155 = vadd.f32 %v1154, %v1092
    %v1156 = vadd.f32 %v1155, %v1093
    %v1157 = vadd.f32 %v1156, %v1094
    %v1158 = vadd.f32 %v1157, %v1095
    %v1159 = vadd.f32 %v1158, %v1096
    %v1160 = vadd.f32 %v1159, %v1097
    %v1161 = vadd.f32 %v1160, %v1098
    %v1162 = vadd.f32 %v1161, %v1099
    %v1163 = vadd.f32 %v1162, %v1100
    %v1164 = vadd.f32 %v1163, %v1101
    %v1165 = vadd.f32 %v1164, %v1102
    %v1166 = vadd.f32 %v1165, %v1103
    %v1167 = vadd.f32 %v1166, %v1104
    %v1168 = vadd.f32 %v1167, %v1105
    %v1169 = vadd.f32 %v1168, %v1106
    %v1170 = vadd.f32 %v1169, %v1107
    %v1171 = vadd.f32 %v1170, %v1108
    %v1172 = vadd.f32 %v1171, %v1109
    %v1173 = vadd.f32 %v1172, %v1110
    %v1174 = vadd.f32 %v1173, %v1111
    %v1175 = vadd.f32 %v1174, %v1112
    %v1176 = vadd.f32 %v1175, %v1113
    %v1177 = vadd.f32 %v1176, %v1114
    %v1178 = vadd.f32 %v1177, %v1115
    %v1179 = vadd.f32 %v1178, %v1116
    %v1180 = vadd.f32 %v1179, %v1117
    %v1181 = vadd.f32 %v1180, %v1118
    %v1182 = vadd.f32 %v1181, %v1119
    %v1183 = vadd.f32 %v1182, %v1120
    %v1184 = vadd.f32 %v1183, %v1121
    %v1185 = vadd.f32 %v1184, %v1122
    %v1186 = vadd.f32 %v1185, %v1123
    %v1187 = vadd.f32 %v1186, %v1124
    %v1188 = vadd.f32 %v1187, %v1125
    %v1189 = vadd.f32 %v1188, %v1126
    %v1190 = vadd.f32 %v1189, %v1127
    %v1191 = vadd.f32 %v1190, %v1128
    %v1192 = vadd.f32 %v1191, %v1129
    %v1193 = vadd.f32 %v1192, %v1130
    %v1194 = vadd.f32 %v1193, %v1131
    %v1195 = vadd.f32 %v1194, %v1132
    %v1196 = vadd.f32 %v1195, %v1133
    %v1197 = vadd.f32 %v1196, %v1134
    %v1198 = vadd.f32 %v1197, %v1135
    %v1199 = vadd.f32 %v1198, %v1136
    %v1200 = vadd.f32 %v1199, %v1137
    %v1201 = vadd.f32 %v1200, %v1138
    %v1202 = vadd.f32 %v1201, %v1139
    %v1203 = vadd.f32 %v1202, %v1140
    %v1204 = vadd.f32 %v1203, %v1141
    %v1205 = vadd.f32 %v1204, %v1142
    %v1206 = vadd.f32 %v1205, %v1143
    %v1207 = vadd.f32 %v1206, %v1144
    %v1208 = vadd.f32 %v1207, %v1145
    %v1209 = vadd.f32 %v1208, %v1146
    %v1210 = vadd.f32 %v1209, %v1147
    %v1211 = vadd.f32 %v1210, %v1148
    %v1212 = vadd.f32 %v1211, %v1149
    %v1213 = vadd.f32 %v1212, %v1150
    %v1214 = vadd.f32 %v1213, %v1151
    %v1215 = vadd.f32 %v1214, %v1152
    %v1216 = vadd.f32 %v1215, %v1153
    %v1217 = vrot.slane %v1216, 4
    %v1218 = vadd.f32 %v1216, %v1217
    %v1219 = vrot.slane %v1218, 2
    %v1220 = vadd.f32 %v1218, %v1219
    %v1221 = vrot.slane %v1220, 1
    %v1222 = vadd.f32 %v1220, %v1221
    %v1223 = vld [vmem:[#allocation8] sm:$0x1]
    %v1224 = vadd.f32 %v1223, %v1089
    %1225 = vst [vmem:[#allocation8] sm:$0x1] %v1224
    %v1226 = vld [vmem:[#allocation10] sm:$0x1]
    %v1227 = vadd.f32 %v1226, %v1222
    %1228 = vst [vmem:[#allocation10] sm:$0x1] %v1227
    // Predicated region
    $region22: #{tpu_custom_call.1} parent=1 // pred_check
      _
    $region23: #{tpu_custom_call.1} parent=1 // pred_check_branch
      %1230 = sbr.rel (0) target = $region25
    $region24: #{tpu_custom_call.1} parent=1 // pred_region
      %s1231 = sadd.s32 0, 0
      %s1232 = sadd.s32 %s1231, 0
      %s1233 = smul.u32 2, %s1232
      %s1235 = ssub.s32 4096, 4096
      %1236 = vsyncadd [#allocation4], %s1235
      %s1237 = smul.addr %s1233, 32
      %s1238 = smul.addr %s1237, 64
      %s1239 = scalar_lea.hbm %s2, %s1238
      %s1240 = sshll.u32 [#allocation7], 4
      %s1241 = int_to_ptr.vmem [resolvable:$true] %s1240
      %1246 = dma.vmem_to_hbm [thread:$0]  %s1241, 4096, %s1239, [#allocation4], 64, 64, 4
    $region25: #{tpu_custom_call.1} parent=1 // pred_fallthru
      _
    // Predicated region
    $region26: #{tpu_custom_call.1} parent=1 // pred_check
      _
    $region27: #{tpu_custom_call.1} parent=1 // pred_check_branch
      %1248 = sbr.rel (0) target = $region29
    $region28: #{tpu_custom_call.1} parent=1 // pred_region
      %s1249 = sadd.s32 0, 0
      %s1251 = ssub.s32 16, 16
      %1252 = vsyncadd [#allocation9], %s1251
      %s1253 = smul.addr %s1249, 16
      %s1254 = scalar_lea.hbm %s3, %s1253
      %s1256 = sshll.u32 [#allocation8], 4
      %s1257 = int_to_ptr.vmem [resolvable:$true] %s1256
      %1259 = dma.vmem_to_hbm [thread:$0]  %s1257, 16, %s1254, [#allocation9]
    $region29: #{tpu_custom_call.1} parent=1 // pred_fallthru
      _
    // Predicated region
    $region30: #{tpu_custom_call.1} parent=1 // pred_check
      _
    $region31: #{tpu_custom_call.1} parent=1 // pred_check_branch
      %1261 = sbr.rel (0) target = $region33
    $region32: #{tpu_custom_call.1} parent=1 // pred_region
      %s1262 = sadd.s32 0, 0
      %s1264 = ssub.s32 16, 16
      %1265 = vsyncadd [#allocation9], %s1264
      %s1266 = smul.addr %s1262, 16
      %s1267 = scalar_lea.hbm %s4, %s1266
      %s1269 = sshll.u32 [#allocation10], 4
      %s1270 = int_to_ptr.vmem [resolvable:$true] %s1269
      %1272 = dma.vmem_to_hbm [thread:$0]  %s1270, 16, %s1267, [#allocation9]
    $region33: #{tpu_custom_call.1} parent=1 // pred_fallthru
      _
    // Predicated region
    $region34: #{tpu_custom_call.1} parent=1 // pred_check
      _
    $region35: #{tpu_custom_call.1} parent=1 // pred_check_branch
      %1274 = sbr.rel (0) target = $region37
    $region36: #{tpu_custom_call.1} parent=1 // pred_region
      %1275 = dma.done [#allocation4], 4096
    $region37: #{tpu_custom_call.1} parent=1 // pred_fallthru
      _
    // Predicated region
    $region38: #{tpu_custom_call.1} parent=1 // pred_check
      _
    $region39: #{tpu_custom_call.1} parent=1 // pred_check_branch
      %1277 = sbr.rel (0) target = $region41
    $region40: #{tpu_custom_call.1} parent=1 // pred_region
      %1278 = dma.done [#allocation9], 16
    $region41: #{tpu_custom_call.1} parent=1 // pred_fallthru
      _
    // Predicated region
    $region42: #{tpu_custom_call.1} parent=1 // pred_check
      _
    $region43: #{tpu_custom_call.1} parent=1 // pred_check_branch
      %1280 = sbr.rel (0) target = $region45
    $region44: #{tpu_custom_call.1} parent=1 // pred_region
      %1281 = dma.done [#allocation9], 16
    $region45: #{tpu_custom_call.1} parent=1 // pred_fallthru
      _
    %1282 = vsyncpa [#allocation3], 1
    %1283 = vsyncpa [#allocation6], 1
    %1284 = vsyncpa [#allocation4], 1
    %1285 = vsyncpa [#allocation9], 1

</llo_original>
